<compile_context>
chip_gen: v6e
topology: v6e:2x2x1
jax: 0.10.0
libtpu: 0.0.40
codegen_flags: <defaults>
</compile_context>

<pallas_src>
import functools
import math

import jax
import jax.numpy as jnp
import numpy as np
from jax import lax
from jax.experimental import pallas as pl
from jax.experimental.pallas import tpu as pltpu


def _self_attention_kernel(x_ref, wqkv_ref, bqkv_ref, o_ref, *,
                           num_heads, head_dim, matmul_bf16):
    # x_ref block:    (1, S, H)   -> one batch element
    # wqkv_ref block: (H, 3H)     -> fused [Wq | Wk | Wv] (Wq pre-scaled by 1/sqrt(dh))
    # bqkv_ref block: (1, 3H)
    # o_ref block:    (1, S, H)   -> context in BERT's [B, S, H] layout
    H = num_heads * head_dim

    x = x_ref[0]                       # [S, H]
    w = wqkv_ref[...]                  # [H, 3H]
    b = bqkv_ref[...]                  # [1, 3H]

    if matmul_bf16:
        x_mm = x.astype(jnp.bfloat16)
        w_mm = w.astype(jnp.bfloat16)
    else:
        x_mm, w_mm = x, w

    # One fused projection: columns are [q (all heads) | k (all heads) | v (all heads)].
    qkv = jnp.dot(x_mm, w_mm, preferred_element_type=jnp.float32) + b   # [S, 3H] f32

    ctx_heads = []
    for h in range(num_heads):                       # small, unrolled
        q = qkv[:, h * head_dim:(h + 1) * head_dim]              # [S, dh] (pre-scaled)
        k = qkv[:, H + h * head_dim:H + (h + 1) * head_dim]      # [S, dh]
        v = qkv[:, 2 * H + h * head_dim:2 * H + (h + 1) * head_dim]

        # scores = q @ k^T, contracting last dims directly (no materialized k.T).
        scores = lax.dot_general(q, k, (((1,), (1,)), ((), ())),
                                 preferred_element_type=jnp.float32)    # [S, S]

        # Softmax over the key axis (BertSelfAttention uses Softmax(dim=-1)).
        # Additive attention mask omitted: the module always passes zeros.
        m = jnp.max(scores, axis=-1, keepdims=True)
        e = jnp.exp(scores - m)
        denom = jnp.sum(e, axis=-1, keepdims=True)
        attn = e * pl.reciprocal(denom, approx=True)                    # [S, S]
        # (attention-probs dropout is identity at eval time)

        if matmul_bf16:
            ctx = jnp.dot(attn.astype(jnp.bfloat16), v.astype(jnp.bfloat16),
                          preferred_element_type=jnp.float32)
        else:
            ctx = jnp.dot(attn, v, preferred_element_type=jnp.float32)  # [S, dh]
        ctx_heads.append(ctx)

    # Head h occupies columns [h*dh, (h+1)*dh) — identical to BERT's
    # permute(0,2,1,3).view(B,S,H) of the per-head context.
    ctx_all = jnp.concatenate(ctx_heads, axis=-1)                       # [S, H]
    o_ref[0] = jnp.tanh(ctx_all).astype(o_ref.dtype)


def self_attention_forward(x, wq, wk, wv, bq, bk, bv, num_heads,
                           matmul_bf16=False):
    """Pallas implementation of tanh(BertSelfAttention(x, zero_mask)[0]).

    x:        [B, S, H] float32
    wq/wk/wv: [H, H] PyTorch nn.Linear weights (out_features, in_features)
    bq/bk/bv: [H]
    """
    B, S, H = x.shape
    dh = H // num_heads
    scale = 1.0 / math.sqrt(dh)

    # PyTorch linear: y = x @ W.T + b.  Fuse Q/K/V into one [H, 3H] weight with
    # columns [q | k | v]; fold the attention scale into the Q weights & bias.
    w_qkv = jnp.concatenate([wq.T * scale, wk.T, wv.T], axis=1)          # [H, 3H]
    b_qkv = jnp.concatenate([bq * scale, bk, bv], axis=0).reshape(1, 3 * H)

    return pl.pallas_call(
        functools.partial(_self_attention_kernel,
                          num_heads=num_heads, head_dim=dh,
                          matmul_bf16=matmul_bf16),
        out_shape=jax.ShapeDtypeStruct((B, S, H), x.dtype),
        grid=(B,),
        in_specs=[
            pl.BlockSpec((1, S, H), lambda b: (b, 0, 0)),     # x: one batch element
            pl.BlockSpec((H, 3 * H), lambda b: (0, 0)),       # fused QKV weights (resident)
            pl.BlockSpec((1, 3 * H), lambda b: (0, 0)),       # fused QKV bias (resident)
        ],
        out_specs=pl.BlockSpec((1, S, H), lambda b: (b, 0, 0)),
        compiler_params=pltpu.CompilerParams(
            dimension_semantics=("parallel",)),
    )(x, w_qkv, b_qkv)


def _reference(x, wq, wk, wv, bq, bk, bv, num_heads):
    B, S, H = x.shape
    dh = H // num_heads

    def split_heads(t):  # [B, S, H] -> [B, nh, S, dh]
        return t.reshape(B, S, num_heads, dh).transpose(0, 2, 1, 3)

    q = split_heads(x @ wq.T + bq)
    k = split_heads(x @ wk.T + bk)
    v = split_heads(x @ wv.T + bv)
    scores = jnp.einsum("bhqd,bhkd->bhqk", q, k) / math.sqrt(dh)
    attn = jax.nn.softmax(scores, axis=-1)
    ctx = jnp.einsum("bhqk,bhkd->bhqd", attn, v)
    ctx = ctx.transpose(0, 2, 1, 3).reshape(B, S, H)
    return jnp.tanh(ctx)


if __name__ == "__main__":
    # Small shapes consistent with the module: batch=2, max_seq_len=8, hidden=32, heads=4
    B, S, H, NH = 2, 8, 32, 4

    key = jax.random.PRNGKey(0)
    kx, kq, kk, kv, kbq, kbk, kbv = jax.random.split(key, 7)

    x = jax.random.normal(kx, (B, S, H), dtype=jnp.float32)
    scale = 1.0 / math.sqrt(H)
    wq = jax.random.normal(kq, (H, H), dtype=jnp.float32) * scale
    wk = jax.random.normal(kk, (H, H), dtype=jnp.float32) * scale
    wv = jax.random.normal(kv, (H, H), dtype=jnp.float32) * scale
    bq = jax.random.normal(kbq, (H,), dtype=jnp.float32) * 0.01
    bk = jax.random.normal(kbk, (H,), dtype=jnp.float32) * 0.01
    bv = jax.random.normal(kbv, (H,), dtype=jnp.float32) * 0.01

    out = self_attention_forward(x, wq, wk, wv, bq, bk, bv, NH)
    out = jax.block_until_ready(out)

    ref = _reference(x, wq, wk, wv, bq, bk, bv, NH)
    # Slightly loosened tolerance: softmax normalization uses the EUP's
    # approximate reciprocal (pl.reciprocal(approx=True)).
    np.testing.assert_allclose(np.asarray(out), np.asarray(ref),
                               rtol=5e-3, atol=5e-3)

    print("KERNEL_OK")
</pallas_src>

<mosaic_0001>
module attributes {stable_mosaic.version = 11 : i64} {
  func.func @_self_attention_kernel(%arg0: i32, %arg1: memref<1x8x32xf32, #tpu.memory_space<vmem>>, %arg2: memref<32x96xf32, #tpu.memory_space<vmem>>, %arg3: memref<1x96xf32, #tpu.memory_space<vmem>>, %arg4: memref<1x8x32xf32, #tpu.memory_space<vmem>>) attributes {dimension_semantics = [#tpu.dimension_semantics<parallel>], iteration_bounds = array<i64: 2>, scalar_prefetch = 0 : i64, scratch_operands = 0 : i64, tpu.core_type = #tpu.core_type<tc>, window_params = [{transform_indices = @transform_0, window_bounds = array<i64: 1, 8, 32>}, {pipeline_mode = #tpu.pipeline_mode<synchronous>, transform_indices = @transform_1, window_bounds = array<i64: 32, 96>}, {pipeline_mode = #tpu.pipeline_mode<synchronous>, transform_indices = @transform_2, window_bounds = array<i64: 1, 96>}, {transform_indices = @transform_3, window_bounds = array<i64: 1, 8, 32>}]} {
    %c0 = arith.constant 0 : index
    %c0_0 = arith.constant 0 : index
    %c0_1 = arith.constant 0 : index
    %0 = vector.load %arg1[%c0, %c0_0, %c0_1] : memref<1x8x32xf32, #tpu.memory_space<vmem>>, vector<1x8x32xf32>
    %1 = vector.shape_cast %0 : vector<1x8x32xf32> to vector<8x32xf32>
    %c0_2 = arith.constant 0 : index
    %c0_3 = arith.constant 0 : index
    %2 = vector.load %arg2[%c0_2, %c0_3] : memref<32x96xf32, #tpu.memory_space<vmem>>, vector<32x96xf32>
    %c0_4 = arith.constant 0 : index
    %c0_5 = arith.constant 0 : index
    %3 = vector.load %arg3[%c0_4, %c0_5] : memref<1x96xf32, #tpu.memory_space<vmem>>, vector<1x96xf32>
    %cst = arith.constant dense<0.000000e+00> : vector<8x96xf32>
    %4 = tpu.matmul %1, %2, %cst {dimension_numbers = #tpu.dot_dimension_numbers<[1], [0], [0], [1], [0, 0, 1, 1], [], []>} : vector<8x32xf32>, vector<32x96xf32>, vector<8x96xf32> -> vector<8x96xf32>
    %5 = vector.broadcast %3 : vector<1x96xf32> to vector<8x96xf32>
    %6 = arith.addf %4, %5 : vector<8x96xf32>
    %7 = vector.extract_strided_slice %6 {offsets = [0, 0], sizes = [8, 8], strides = [1, 1]} : vector<8x96xf32> to vector<8x8xf32>
    %8 = vector.extract_strided_slice %6 {offsets = [0, 32], sizes = [8, 8], strides = [1, 1]} : vector<8x96xf32> to vector<8x8xf32>
    %9 = vector.extract_strided_slice %6 {offsets = [0, 64], sizes = [8, 8], strides = [1, 1]} : vector<8x96xf32> to vector<8x8xf32>
    %cst_6 = arith.constant dense<0.000000e+00> : vector<8x8xf32>
    %10 = tpu.matmul %7, %8, %cst_6 {dimension_numbers = #tpu.dot_dimension_numbers<[1], [1], [0], [0], [0, 0, 1, 0], [], []>} : vector<8x8xf32>, vector<8x8xf32>, vector<8x8xf32> -> vector<8x8xf32>
    %cst_7 = arith.constant dense<0xFF800000> : vector<8xf32>
    %11 = vector.multi_reduction <maximumf>, %10, %cst_7 [1] : vector<8x8xf32> to vector<8xf32>
    %12 = vector.shape_cast %11 : vector<8xf32> to vector<8x1xf32>
    %13 = vector.broadcast %12 : vector<8x1xf32> to vector<8x8xf32>
    %14 = arith.subf %10, %13 : vector<8x8xf32>
    %15 = math.exp %14 : vector<8x8xf32>
    %cst_8 = arith.constant dense<0.000000e+00> : vector<8xf32>
    %16 = vector.multi_reduction <add>, %15, %cst_8 [1] : vector<8x8xf32> to vector<8xf32>
    %17 = vector.shape_cast %16 : vector<8xf32> to vector<8x1xf32>
    %18 = tpu.reciprocal %17 {approx = true} : vector<8x1xf32> -> vector<8x1xf32>
    %19 = vector.broadcast %18 : vector<8x1xf32> to vector<8x8xf32>
    %20 = arith.mulf %15, %19 : vector<8x8xf32>
    %cst_9 = arith.constant dense<0.000000e+00> : vector<8x8xf32>
    %21 = tpu.matmul %20, %9, %cst_9 {dimension_numbers = #tpu.dot_dimension_numbers<[1], [0], [0], [1], [0, 0, 1, 1], [], []>} : vector<8x8xf32>, vector<8x8xf32>, vector<8x8xf32> -> vector<8x8xf32>
    %22 = vector.extract_strided_slice %6 {offsets = [0, 8], sizes = [8, 8], strides = [1, 1]} : vector<8x96xf32> to vector<8x8xf32>
    %23 = vector.extract_strided_slice %6 {offsets = [0, 40], sizes = [8, 8], strides = [1, 1]} : vector<8x96xf32> to vector<8x8xf32>
    %24 = vector.extract_strided_slice %6 {offsets = [0, 72], sizes = [8, 8], strides = [1, 1]} : vector<8x96xf32> to vector<8x8xf32>
    %cst_10 = arith.constant dense<0.000000e+00> : vector<8x8xf32>
    %25 = tpu.matmul %22, %23, %cst_10 {dimension_numbers = #tpu.dot_dimension_numbers<[1], [1], [0], [0], [0, 0, 1, 0], [], []>} : vector<8x8xf32>, vector<8x8xf32>, vector<8x8xf32> -> vector<8x8xf32>
    %cst_11 = arith.constant dense<0xFF800000> : vector<8xf32>
    %26 = vector.multi_reduction <maximumf>, %25, %cst_11 [1] : vector<8x8xf32> to vector<8xf32>
    %27 = vector.shape_cast %26 : vector<8xf32> to vector<8x1xf32>
    %28 = vector.broadcast %27 : vector<8x1xf32> to vector<8x8xf32>
    %29 = arith.subf %25, %28 : vector<8x8xf32>
    %30 = math.exp %29 : vector<8x8xf32>
    %cst_12 = arith.constant dense<0.000000e+00> : vector<8xf32>
    %31 = vector.multi_reduction <add>, %30, %cst_12 [1] : vector<8x8xf32> to vector<8xf32>
    %32 = vector.shape_cast %31 : vector<8xf32> to vector<8x1xf32>
    %33 = tpu.reciprocal %32 {approx = true} : vector<8x1xf32> -> vector<8x1xf32>
    %34 = vector.broadcast %33 : vector<8x1xf32> to vector<8x8xf32>
    %35 = arith.mulf %30, %34 : vector<8x8xf32>
    %cst_13 = arith.constant dense<0.000000e+00> : vector<8x8xf32>
    %36 = tpu.matmul %35, %24, %cst_13 {dimension_numbers = #tpu.dot_dimension_numbers<[1], [0], [0], [1], [0, 0, 1, 1], [], []>} : vector<8x8xf32>, vector<8x8xf32>, vector<8x8xf32> -> vector<8x8xf32>
    %37 = vector.extract_strided_slice %6 {offsets = [0, 16], sizes = [8, 8], strides = [1, 1]} : vector<8x96xf32> to vector<8x8xf32>
    %38 = vector.extract_strided_slice %6 {offsets = [0, 48], sizes = [8, 8], strides = [1, 1]} : vector<8x96xf32> to vector<8x8xf32>
    %39 = vector.extract_strided_slice %6 {offsets = [0, 80], sizes = [8, 8], strides = [1, 1]} : vector<8x96xf32> to vector<8x8xf32>
    %cst_14 = arith.constant dense<0.000000e+00> : vector<8x8xf32>
    %40 = tpu.matmul %37, %38, %cst_14 {dimension_numbers = #tpu.dot_dimension_numbers<[1], [1], [0], [0], [0, 0, 1, 0], [], []>} : vector<8x8xf32>, vector<8x8xf32>, vector<8x8xf32> -> vector<8x8xf32>
    %cst_15 = arith.constant dense<0xFF800000> : vector<8xf32>
    %41 = vector.multi_reduction <maximumf>, %40, %cst_15 [1] : vector<8x8xf32> to vector<8xf32>
    %42 = vector.shape_cast %41 : vector<8xf32> to vector<8x1xf32>
    %43 = vector.broadcast %42 : vector<8x1xf32> to vector<8x8xf32>
    %44 = arith.subf %40, %43 : vector<8x8xf32>
    %45 = math.exp %44 : vector<8x8xf32>
    %cst_16 = arith.constant dense<0.000000e+00> : vector<8xf32>
    %46 = vector.multi_reduction <add>, %45, %cst_16 [1] : vector<8x8xf32> to vector<8xf32>
    %47 = vector.shape_cast %46 : vector<8xf32> to vector<8x1xf32>
    %48 = tpu.reciprocal %47 {approx = true} : vector<8x1xf32> -> vector<8x1xf32>
    %49 = vector.broadcast %48 : vector<8x1xf32> to vector<8x8xf32>
    %50 = arith.mulf %45, %49 : vector<8x8xf32>
    %cst_17 = arith.constant dense<0.000000e+00> : vector<8x8xf32>
    %51 = tpu.matmul %50, %39, %cst_17 {dimension_numbers = #tpu.dot_dimension_numbers<[1], [0], [0], [1], [0, 0, 1, 1], [], []>} : vector<8x8xf32>, vector<8x8xf32>, vector<8x8xf32> -> vector<8x8xf32>
    %52 = vector.extract_strided_slice %6 {offsets = [0, 24], sizes = [8, 8], strides = [1, 1]} : vector<8x96xf32> to vector<8x8xf32>
    %53 = vector.extract_strided_slice %6 {offsets = [0, 56], sizes = [8, 8], strides = [1, 1]} : vector<8x96xf32> to vector<8x8xf32>
    %54 = vector.extract_strided_slice %6 {offsets = [0, 88], sizes = [8, 8], strides = [1, 1]} : vector<8x96xf32> to vector<8x8xf32>
    %cst_18 = arith.constant dense<0.000000e+00> : vector<8x8xf32>
    %55 = tpu.matmul %52, %53, %cst_18 {dimension_numbers = #tpu.dot_dimension_numbers<[1], [1], [0], [0], [0, 0, 1, 0], [], []>} : vector<8x8xf32>, vector<8x8xf32>, vector<8x8xf32> -> vector<8x8xf32>
    %cst_19 = arith.constant dense<0xFF800000> : vector<8xf32>
    %56 = vector.multi_reduction <maximumf>, %55, %cst_19 [1] : vector<8x8xf32> to vector<8xf32>
    %57 = vector.shape_cast %56 : vector<8xf32> to vector<8x1xf32>
    %58 = vector.broadcast %57 : vector<8x1xf32> to vector<8x8xf32>
    %59 = arith.subf %55, %58 : vector<8x8xf32>
    %60 = math.exp %59 : vector<8x8xf32>
    %cst_20 = arith.constant dense<0.000000e+00> : vector<8xf32>
    %61 = vector.multi_reduction <add>, %60, %cst_20 [1] : vector<8x8xf32> to vector<8xf32>
    %62 = vector.shape_cast %61 : vector<8xf32> to vector<8x1xf32>
    %63 = tpu.reciprocal %62 {approx = true} : vector<8x1xf32> -> vector<8x1xf32>
    %64 = vector.broadcast %63 : vector<8x1xf32> to vector<8x8xf32>
    %65 = arith.mulf %60, %64 : vector<8x8xf32>
    %cst_21 = arith.constant dense<0.000000e+00> : vector<8x8xf32>
    %66 = tpu.matmul %65, %54, %cst_21 {dimension_numbers = #tpu.dot_dimension_numbers<[1], [0], [0], [1], [0, 0, 1, 1], [], []>} : vector<8x8xf32>, vector<8x8xf32>, vector<8x8xf32> -> vector<8x8xf32>
    %67 = tpu.concatenate %21, %36, %51, %66 in 1 : vector<8x8xf32>, vector<8x8xf32>, vector<8x8xf32>, vector<8x8xf32> -> vector<8x32xf32>
    %68 = math.tanh %67 : vector<8x32xf32>
    %c0_22 = arith.constant 0 : index
    %c0_23 = arith.constant 0 : index
    %c0_24 = arith.constant 0 : index
    %69 = vector.load %arg4[%c0_22, %c0_23, %c0_24] : memref<1x8x32xf32, #tpu.memory_space<vmem>>, vector<1x8x32xf32>
    %70 = vector.shape_cast %69 : vector<1x8x32xf32> to vector<8x32xf32>
    %71 = vector.shape_cast %68 : vector<8x32xf32> to vector<1x8x32xf32>
    tpu.vector_store %arg4[%c0_22, %c0_23, %c0_24], %71 {strides = array<i32>} : memref<1x8x32xf32, #tpu.memory_space<vmem>>, vector<1x8x32xf32>,
    return
  }
  func.func @transform_0(%arg0: i32) -> (i32, i32, i32) {
    %c0_i32 = arith.constant 0 : i32
    %c0_i32_0 = arith.constant 0 : i32
    %c0_i32_1 = arith.constant 0 : i32
    return %arg0, %c0_i32, %c0_i32_0 : i32, i32, i32
  }
  func.func @transform_1(%arg0: i32) -> (i32, i32) {
    %c0_i32 = arith.constant 0 : i32
    %c0_i32_0 = arith.constant 0 : i32
    %c0_i32_1 = arith.constant 0 : i32
    return %c0_i32, %c0_i32_0 : i32, i32
  }
  func.func @transform_2(%arg0: i32) -> (i32, i32) {
    %c0_i32 = arith.constant 0 : i32
    %c0_i32_0 = arith.constant 0 : i32
    %c0_i32_1 = arith.constant 0 : i32
    return %c0_i32, %c0_i32_0 : i32, i32
  }
  func.func @transform_3(%arg0: i32) -> (i32, i32, i32) {
    %c0_i32 = arith.constant 0 : i32
    %c0_i32_0 = arith.constant 0 : i32
    %c0_i32_1 = arith.constant 0 : i32
    return %arg0, %c0_i32, %c0_i32_0 : i32, i32, i32
  }
}

</mosaic_0001>

<llo_original>
// kernel: tpu_custom_call.1
$region0: #{tpu_custom_call.1}
  #allocation0 [shape = 'u32[]', space=smem, size = 0x4, offset = 0x4, fixed_abs, tag = 'smem constant byte address 0x4 - core index']
  #allocation1 [shape = 'u32[144,128]{1,0:T(1,128)}', space=vmem, size = 0x12000, scoped, tag = 'internal scratch']
  %s0 = inlined_call_operand.hbm [shape: f32[2,8,32], index: 0, kind: input, shape index: {}]
  %s1 = inlined_call_operand.hbm [shape: f32[32,96], index: 1, kind: input, shape index: {}]
  %s2 = inlined_call_operand.vmem [shape: f32[1,96], index: 2, kind: input, shape index: {}]
  %s3 = inlined_call_operand.hbm [shape: f32[2,8,32], index: 3, kind: output, shape index: {}]
  %s4 = sld [smem:[#allocation0]]
  $region53: #{tpu_custom_call.1} parent=0
    _
  %s6 = ssub.s32 1, %s4
  %s7 = scalar_select 0, %s6, %s4
  $region1: #{tpu_custom_call.1} parent=0
    #allocation2 [shape = 'u8[8192]{0}', space=vmem, size = 0x2000, scoped, tag = 'input window, operand 0']
    #allocation3 [shape = 's32[2]{0}', space=sflag, size = 0x8, scoped, tag = 'scoped memory for tpu_custom_call.1']
    #allocation4 [shape = 's32[2]{0}', space=sflag, size = 0x8, scoped, tag = 'scoped memory for tpu_custom_call.1']
    #allocation5 [shape = 'u8[16384]{0}', space=vmem, size = 0x4000, scoped, tag = 'input window, operand 1, single buffered']
    #allocation6 [shape = 's32[1]{0}', space=sflag, size = 0x4, scoped, tag = 'scoped memory for tpu_custom_call.1']
    #allocation7 [shape = 'u8[8192]{0}', space=vmem, size = 0x2000, scoped, tag = 'output window, operand 0']
    %8 = vsyncpa [#allocation3], 0
    %s9 = scalar_lea.sflag [#allocation3], 1
    %10 = vsyncpa %s9, 0
    %11 = vsyncpa [#allocation6], 0
    %12 = vsyncpa [#allocation4], 0
    %s13 = scalar_lea.sflag [#allocation4], 1
    %14 = vsyncpa %s13, 0
    loop: start=0, step=1, limit=4
    $region2: #{tpu_custom_call.1} parent=1 // loop_pre_header
      _
    $region3: #{tpu_custom_call.1} parent=1 // loop_header
      %s16 = sphi 0, %s20
      %p17 = scmp.ge.s32.totalorder %s16, 4
      %s26 = sphi 0, %s28
      %s29 = sphi 0, %s26
      %s30 = sphi 0, %s29
      %s46 = sphi 0, %s30
      %s50 = sphi 0, %s50
      %s52 = sphi 0, %s50
      %s53 = sphi 0, %s52
      %s67 = sphi 0, %s53
      %s71 = sphi 0, %s71
      %s73 = sphi 0, %s71
      %s74 = sphi 0, %s73
      %s88 = sphi 0, %s74
      %s94 = sphi 0, %s96
      %s97 = sphi 0, %s94
      %s98 = sphi 0, %s97
      %s114 = sphi 0, %s98
    $region4: #{tpu_custom_call.1} parent=1 // loop_header_branch
      %19 = sbr.rel (%p17) target = $region8
    $region5: #{tpu_custom_call.1} parent=1 // loop_body
      %s21 = ssub.s32 %s16, 1
      %s22 = ssub.s32 %s16, 2
      %s23 = sadd.s32 %s16, 1
      %s24 = ssub.s32 %s16, %s23
      %p25 = scmp.eq.s32.totalorder %s24, 0
      %s27 = sadd.s32 %s26, 1
      %s28 = scalar_select %p25, %s26, %s27
      %p31 = pneg %p25
      %p32 = scmp.eq.s32.totalorder %s16, 1
      %p33 = por %p31, %p32
      %p34 = scmp.ne.s32.totalorder %s26, %s29
      %p35 = scmp.eq.s32.totalorder %s16, 0
      %p36 = por %p34, %p35
      %p37 = scmp.ne.s32.totalorder %s26, %s29
      %p38 = scmp.eq.s32.totalorder %s21, 1
      %p39 = por %p37, %p38
      %p40 = scmp.ne.s32.totalorder %s29, %s30
      %p41 = scmp.eq.s32.totalorder %s21, 0
      %p42 = por %p40, %p41
      %p43 = scmp.ne.s32.totalorder %s29, %s30
      %p44 = scmp.eq.s32.totalorder %s22, 1
      %p45 = por %p43, %p44
      %p47 = scmp.ne.s32.totalorder %s30, %s46
      %p48 = scmp.eq.s32.totalorder %s22, 0
      %p49 = por %p47, %p48
      %s51 = sadd.s32 %s50, 1
      %p54 = scmp.eq.s32.totalorder %s16, 1
      %p55 = scmp.ne.s32.totalorder %s50, %s52
      %p56 = scmp.eq.s32.totalorder %s16, 0
      %p57 = por %p55, %p56
      %p58 = scmp.ne.s32.totalorder %s50, %s52
      %p59 = scmp.eq.s32.totalorder %s21, 1
      %p60 = por %p58, %p59
      %p61 = scmp.ne.s32.totalorder %s52, %s53
      %p62 = scmp.eq.s32.totalorder %s21, 0
      %p63 = por %p61, %p62
      %p64 = scmp.ne.s32.totalorder %s52, %s53
      %p65 = scmp.eq.s32.totalorder %s22, 1
      %p66 = por %p64, %p65
      %p68 = scmp.ne.s32.totalorder %s53, %s67
      %p69 = scmp.eq.s32.totalorder %s22, 0
      %p70 = por %p68, %p69
      %s72 = sadd.s32 %s71, 1
      %p75 = scmp.eq.s32.totalorder %s16, 1
      %p76 = scmp.ne.s32.totalorder %s71, %s73
      %p77 = scmp.eq.s32.totalorder %s16, 0
      %p78 = por %p76, %p77
      %p79 = scmp.ne.s32.totalorder %s71, %s73
      %p80 = scmp.eq.s32.totalorder %s21, 1
      %p81 = por %p79, %p80
      %p82 = scmp.ne.s32.totalorder %s73, %s74
      %p83 = scmp.eq.s32.totalorder %s21, 0
      %p84 = por %p82, %p83
      %p85 = scmp.ne.s32.totalorder %s73, %s74
      %p86 = scmp.eq.s32.totalorder %s22, 1
      %p87 = por %p85, %p86
      %p89 = scmp.ne.s32.totalorder %s74, %s88
      %p90 = scmp.eq.s32.totalorder %s22, 0
      %p91 = por %p89, %p90
      %s92 = ssub.s32 %s16, %s23
      %p93 = scmp.eq.s32.totalorder %s92, 0
      %s95 = sadd.s32 %s94, 1
      %s96 = scalar_select %p93, %s94, %s95
      %p99 = pneg %p93
      %p100 = scmp.eq.s32.totalorder %s16, 1
      %p101 = por %p99, %p100
      %p102 = scmp.ne.s32.totalorder %s94, %s97
      %p103 = scmp.eq.s32.totalorder %s16, 0
      %p104 = por %p102, %p103
      %p105 = scmp.ne.s32.totalorder %s94, %s97
      %p106 = scmp.eq.s32.totalorder %s21, 1
      %p107 = por %p105, %p106
      %p108 = scmp.ne.s32.totalorder %s97, %s98
      %p109 = scmp.eq.s32.totalorder %s21, 0
      %p110 = por %p108, %p109
      %p111 = scmp.ne.s32.totalorder %s97, %s98
      %p112 = scmp.eq.s32.totalorder %s22, 1
      %p113 = por %p111, %p112
      %p115 = scmp.ne.s32.totalorder %s98, %s114
      %p116 = scmp.eq.s32.totalorder %s22, 0
      %p117 = por %p115, %p116
      %p118 = scmp.le.s32.totalorder 1, %s16
      %p119 = scmp.lt.s32.totalorder %s16, 3
      %p120 = pnand %p118, %p119
      %p121 = pneg %p120
      // Predicated region
      $region9: #{tpu_custom_call.1} parent=5 // pred_check
        _
      $region10: #{tpu_custom_call.1} parent=5 // pred_check_branch
        %123 = sbr.rel (%p120) target = $region12
      $region11: #{tpu_custom_call.1} parent=5 // pred_region
        %s124 = ssub.s32 %s16, 1
        // Predicated region
        $region13: #{tpu_custom_call.1} parent=11 // pred_check
          %p125 = pneg %p63
        $region14: #{tpu_custom_call.1} parent=11 // pred_check_branch
          %127 = sbr.rel (%p125) target = $region16
        $region15: #{tpu_custom_call.1} parent=11 // pred_region
          %s129 = ssub.s32 512, 512
          %130 = vsyncadd [#allocation6], %s129
          %s131 = sshll.u32 [#allocation5], 4
          %s132 = int_to_ptr.vmem [resolvable:$true] %s131
          %137 = dma.hbm_to_vmem [thread:$0]  %s1, 512, %s132, [#allocation6], 128, 128, 8
        $region16: #{tpu_custom_call.1} parent=11 // pred_fallthru
          _
        // Predicated region
        $region17: #{tpu_custom_call.1} parent=11 // pred_check
          %p138 = pneg %p84
        $region18: #{tpu_custom_call.1} parent=11 // pred_check_branch
          %140 = sbr.rel (%p138) target = $region20
        $region19: #{tpu_custom_call.1} parent=11 // pred_region
          _
        $region20: #{tpu_custom_call.1} parent=11 // pred_fallthru
          _
      $region12: #{tpu_custom_call.1} parent=5 // pred_fallthru
        _
      %p141 = scmp.lt.s32.totalorder %s16, 2
      // Predicated region
      $region21: #{tpu_custom_call.1} parent=5 // pred_check
        %p142 = pneg %p141
      $region22: #{tpu_custom_call.1} parent=5 // pred_check_branch
        %144 = sbr.rel (%p142) target = $region24
      $region23: #{tpu_custom_call.1} parent=5 // pred_region
        // Predicated region
        $region25: #{tpu_custom_call.1} parent=23 // pred_check
          %p145 = pneg %p36
        $region26: #{tpu_custom_call.1} parent=23 // pred_check_branch
          %147 = sbr.rel (%p145) target = $region28
        $region27: #{tpu_custom_call.1} parent=23 // pred_region
          %s148 = sand.u32 %s26, 1
          %s149 = scalar_lea.sflag [#allocation3], %s148
          %s150 = sand.u32 %s26, 1
          %s151 = smul.addr %s150, 8
          %s152 = scalar_lea.vmem [#allocation2], %s151
          %s154 = ssub.s32 128, 128
          %155 = vsyncadd %s149, %s154
          %s156 = smul.addr %s16, 128
          %s157 = scalar_lea.hbm %s0, %s156
          %s159 = sshll.u32 %s152, 4
          %s160 = int_to_ptr.vmem [resolvable:$true] %s159
          %162 = dma.hbm_to_vmem [thread:$0]  %s157, 128, %s160, %s149
        $region28: #{tpu_custom_call.1} parent=23 // pred_fallthru
          _
      $region24: #{tpu_custom_call.1} parent=5 // pred_fallthru
        _
      %p163 = scmp.le.s32.totalorder 1, %s16
      %p164 = scmp.lt.s32.totalorder %s16, 3
      %p165 = pnand %p163, %p164
      %p166 = pneg %p165
      // Predicated region
      $region29: #{tpu_custom_call.1} parent=5 // pred_check
        _
      $region30: #{tpu_custom_call.1} parent=5 // pred_check_branch
        %168 = sbr.rel (%p165) target = $region32
      $region31: #{tpu_custom_call.1} parent=5 // pred_region
        %s169 = ssub.s32 %s16, 1
        %s170 = sand.u32 %s29, 1
        %s171 = scalar_lea.sflag [#allocation3], %s170
        %s172 = sand.u32 %s29, 1
        %s173 = smul.addr %s172, 8
        %s174 = scalar_lea.vmem [#allocation2], %s173
        // Predicated region
        $region33: #{tpu_custom_call.1} parent=31 // pred_check
          %p175 = pneg %p42
        $region34: #{tpu_custom_call.1} parent=31 // pred_check_branch
          %177 = sbr.rel (%p175) target = $region36
        $region35: #{tpu_custom_call.1} parent=31 // pred_region
          %178 = dma.done %s171, 128
        $region36: #{tpu_custom_call.1} parent=31 // pred_fallthru
          _
        // Predicated region
        $region37: #{tpu_custom_call.1} parent=31 // pred_check
          %p179 = pneg %p63
        $region38: #{tpu_custom_call.1} parent=31 // pred_check_branch
          %181 = sbr.rel (%p179) target = $region40
        $region39: #{tpu_custom_call.1} parent=31 // pred_region
          %182 = dma.done [#allocation6], 512
        $region40: #{tpu_custom_call.1} parent=31 // pred_fallthru
          _
        %s183 = sand.u32 %s29, 1
        %s184 = scalar_lea.sflag [#allocation3], %s183
        %s185 = sand.u32 %s29, 1
        %s186 = smul.addr %s185, 8
        %s187 = scalar_lea.vmem [#allocation2], %s186
        %p188 = pneg %p42
        %p189 = pneg %p39
        %p190 = pneg %p63
        %p191 = pneg %p60
        %p192 = pneg %p84
        %p193 = pneg %p81
        %p194 = pneg %p110
        %p195 = pneg %p107
        %s196 = sand.u32 %s97, 1
        %s197 = scalar_lea.sflag [#allocation4], %s196
        %s198 = sand.u32 %s97, 1
        %s199 = smul.addr %s198, 8
        %s200 = scalar_lea.vmem [#allocation7], %s199
        %v201 = vld [vmem:[%s174] sm:$0xff]
        %v202 = vld [vmem:[#allocation5] sm:$0xff]
        %v203 = vld [vmem:[#allocation5 + $0x8] sm:$0xff]
        %v204 = vld [vmem:[#allocation5 + $0x10] sm:$0xff]
        %v205 = vld [vmem:[#allocation5 + $0x18] sm:$0xff]
        %v206 = vld [vmem:[%s2] sm:$0x1]
        %v208 = vlaneseq
        %v209 = vshrl.u32 %v208, 7
        %v210 = vsub.s32 0, %v209
        %v211 = vrot.slane %v206, %v210
        %vm213 = vcmask 261120
        %v215 = vsel %vm213, %v201, 0
        %217 = vmatprep.subr.mxu0 0.0
        %218 = vmatpush1.msra.mxu0 0.0
        %219 = vmatprep.subr.mxu0 0.0
        %220 = vmatpush1.msra.mxu0 0.0
        %221 = vmatprep.subr.mxu0 0.0
        %222 = vmatpush1.msra.mxu0 0.0
        %223 = vmatprep.subr.mxu0 0.0
        %224 = vmatpush1.msra.mxu0 0.0
        %225 = vmatprep.subr.mxu0 0.0
        %226 = vmatpush1.msra.mxu0 0.0
        %227 = vmatprep.subr.mxu0 0.0
        %228 = vmatpush1.msra.mxu0 0.0
        %229 = vmatprep.subr.mxu0 0.0
        %230 = vmatpush1.msra.mxu0 0.0
        %231 = vmatprep.subr.mxu0 0.0
        %232 = vmatpush1.msra.mxu0 0.0
        %233 = vmatprep.subr.mxu0 0.0
        %234 = vmatpush1.msra.mxu0 0.0
        %235 = vmatprep.subr.mxu0 0.0
        %236 = vmatpush1.msra.mxu0 0.0
        %237 = vmatprep.subr.mxu0 0.0
        %238 = vmatpush1.msra.mxu0 0.0
        %239 = vmatprep.subr.mxu0 0.0
        %240 = vmatpush1.msra.mxu0 0.0
        %241 = vmatprep.subr.mxu0 0.0
        %242 = vmatpush1.msra.mxu0 %v205
        %243 = vmatprep.subr.mxu0 0.0
        %244 = vmatpush1.msra.mxu0 %v204
        %245 = vmatprep.subr.mxu0 0.0
        %246 = vmatpush1.msra.mxu0 %v203
        %247 = vmatprep.subr.mxu0 0.0
        %248 = vmatpush1.msra.mxu0 %v202
        %249 = vmatprep.subr.mxu0 0.0
        %250 = vmatpush2.msra.mxu0 0.0
        %251 = vmatprep.subr.mxu0 0.0
        %252 = vmatpush2.msra.mxu0 0.0
        %253 = vmatprep.subr.mxu0 0.0
        %254 = vmatpush2.msra.mxu0 0.0
        %255 = vmatprep.subr.mxu0 0.0
        %256 = vmatpush2.msra.mxu0 0.0
        %257 = vmatprep.subr.mxu0 0.0
        %258 = vmatpush2.msra.mxu0 0.0
        %259 = vmatprep.subr.mxu0 0.0
        %260 = vmatpush2.msra.mxu0 0.0
        %261 = vmatprep.subr.mxu0 0.0
        %262 = vmatpush2.msra.mxu0 0.0
        %263 = vmatprep.subr.mxu0 0.0
        %264 = vmatpush2.msra.mxu0 0.0
        %265 = vmatprep.subr.mxu0 0.0
        %266 = vmatpush2.msra.mxu0 0.0
        %267 = vmatprep.subr.mxu0 0.0
        %268 = vmatpush2.msra.mxu0 0.0
        %269 = vmatprep.subr.mxu0 0.0
        %270 = vmatpush2.msra.mxu0 0.0
        %271 = vmatprep.subr.mxu0 0.0
        %272 = vmatpush2.msra.mxu0 0.0
        %273 = vmatprep.subr.mxu0 0.0
        %274 = vmatpush2.msra.mxu0 0.0
        %275 = vmatprep.subr.mxu0 0.0
        %276 = vmatpush2.msra.mxu0 0.0
        %277 = vmatprep.subr.mxu0 0.0
        %278 = vmatpush2.msra.mxu0 0.0
        %279 = vmatprep.subr.mxu0 0.0
        %280 = vmatpush2.msra.mxu0 0.0
        %281 = vmatprep.mubr.f32.mxu0 0.0
        %282 = vmatmul.mubr.f32.gmra.mxu0 %v215
        %v283 = vpop.f32.mrf.mxu0
        %v284 = vadd.f32 %v211, %v283
        %v285 = vpop.f32.mrf.mxu0
        %286 = vdwg.mxu0
        %288 = vrot.lane.b32.xlu0 %v284, 96
        %v289 = vpop.permute.xlu0 %288
        %vm290 = vcmask 64512
        %v291 = vsel %vm290, %v284, 0
        %v293 = vsel %vm290, %v289, 0
        %295 = vmatprep.subr.mxu0 0.0
        %296 = vmatpush1.xpose.msra.mxu0 0.0
        %297 = vmatprep.subr.mxu0 0.0
        %298 = vmatpush1.xpose.msra.mxu0 0.0
        %299 = vmatprep.subr.mxu0 0.0
        %300 = vmatpush1.xpose.msra.mxu0 0.0
        %301 = vmatprep.subr.mxu0 0.0
        %302 = vmatpush1.xpose.msra.mxu0 0.0
        %303 = vmatprep.subr.mxu0 0.0
        %304 = vmatpush1.xpose.msra.mxu0 0.0
        %305 = vmatprep.subr.mxu0 0.0
        %306 = vmatpush1.xpose.msra.mxu0 0.0
        %307 = vmatprep.subr.mxu0 0.0
        %308 = vmatpush1.xpose.msra.mxu0 0.0
        %309 = vmatprep.subr.mxu0 0.0
        %310 = vmatpush1.xpose.msra.mxu0 0.0
        %311 = vmatprep.subr.mxu0 0.0
        %312 = vmatpush1.xpose.msra.mxu0 0.0
        %313 = vmatprep.subr.mxu0 0.0
        %314 = vmatpush1.xpose.msra.mxu0 0.0
        %315 = vmatprep.subr.mxu0 0.0
        %316 = vmatpush1.xpose.msra.mxu0 0.0
        %317 = vmatprep.subr.mxu0 0.0
        %318 = vmatpush1.xpose.msra.mxu0 0.0
        %319 = vmatprep.subr.mxu0 0.0
        %320 = vmatpush1.xpose.msra.mxu0 0.0
        %321 = vmatprep.subr.mxu0 0.0
        %322 = vmatpush1.xpose.msra.mxu0 0.0
        %323 = vmatprep.subr.mxu0 0.0
        %324 = vmatpush1.xpose.msra.mxu0 0.0
        %325 = vmatprep.subr.mxu0 0.0
        %326 = vmatpush1.xpose.msra.mxu0 %v293
        %327 = vmatprep.subr.mxu0 0.0
        %328 = vmatpush2.xpose.msra.mxu0 0.0
        %329 = vmatprep.subr.mxu0 0.0
        %330 = vmatpush2.xpose.msra.mxu0 0.0
        %331 = vmatprep.subr.mxu0 0.0
        %332 = vmatpush2.xpose.msra.mxu0 0.0
        %333 = vmatprep.subr.mxu0 0.0
        %334 = vmatpush2.xpose.msra.mxu0 0.0
        %335 = vmatprep.subr.mxu0 0.0
        %336 = vmatpush2.xpose.msra.mxu0 0.0
        %337 = vmatprep.subr.mxu0 0.0
        %338 = vmatpush2.xpose.msra.mxu0 0.0
        %339 = vmatprep.subr.mxu0 0.0
        %340 = vmatpush2.xpose.msra.mxu0 0.0
        %341 = vmatprep.subr.mxu0 0.0
        %342 = vmatpush2.xpose.msra.mxu0 0.0
        %343 = vmatprep.subr.mxu0 0.0
        %344 = vmatpush2.xpose.msra.mxu0 0.0
        %345 = vmatprep.subr.mxu0 0.0
        %346 = vmatpush2.xpose.msra.mxu0 0.0
        %347 = vmatprep.subr.mxu0 0.0
        %348 = vmatpush2.xpose.msra.mxu0 0.0
        %349 = vmatprep.subr.mxu0 0.0
        %350 = vmatpush2.xpose.msra.mxu0 0.0
        %351 = vmatprep.subr.mxu0 0.0
        %352 = vmatpush2.xpose.msra.mxu0 0.0
        %353 = vmatprep.subr.mxu0 0.0
        %354 = vmatpush2.xpose.msra.mxu0 0.0
        %355 = vmatprep.subr.mxu0 0.0
        %356 = vmatpush2.xpose.msra.mxu0 0.0
        %357 = vmatprep.subr.mxu0 0.0
        %358 = vmatpush2.xpose.msra.mxu0 0.0
        %359 = vmatprep.mubr.f32.mxu0 0.0
        %360 = vmatmul.mubr.f32.gmra.mxu0 %v291
        %v361 = vpop.f32.mrf.mxu0
        %v362 = vadd.f32 0.0, %v361
        %v363 = vpop.f32.mrf.mxu0
        %364 = vdwg.mxu0
        %v365 = vsel %vm290, %v362, -inf
        %366 = vmax.xlane.f32.xlu0 %v365
        %v367 = vpop.xlane.xlu0 %366
        %v368 = vsub.f32 %v362, %v367
        %v369 = vmul.f32 %v368, 1.442695
        %v370 = vpow.pop %v369
        %v371 = vsel %vm290, %v370, 0.0
        %372 = vadd.xlane.f32.xlu0 %v371
        %v373 = vpop.xlane.xlu0 %372
        %v374 = vrcp.pop %v373
        %v375 = vmul.f32 %v370, %v374
        %376 = vrot.lane.b32.xlu0 %v284, 64
        %v377 = vpop.permute.xlu0 %376
        %v380 = vsel %vm290, %v375, 0
        %382 = vmatprep.subr.mxu0 0.0
        %383 = vmatpush1.msra.mxu0 0.0
        %384 = vmatprep.subr.mxu0 0.0
        %385 = vmatpush1.msra.mxu0 0.0
        %386 = vmatprep.subr.mxu0 0.0
        %387 = vmatpush1.msra.mxu0 0.0
        %388 = vmatprep.subr.mxu0 0.0
        %389 = vmatpush1.msra.mxu0 0.0
        %390 = vmatprep.subr.mxu0 0.0
        %391 = vmatpush1.msra.mxu0 0.0
        %392 = vmatprep.subr.mxu0 0.0
        %393 = vmatpush1.msra.mxu0 0.0
        %394 = vmatprep.subr.mxu0 0.0
        %395 = vmatpush1.msra.mxu0 0.0
        %396 = vmatprep.subr.mxu0 0.0
        %397 = vmatpush1.msra.mxu0 0.0
        %398 = vmatprep.subr.mxu0 0.0
        %399 = vmatpush1.msra.mxu0 0.0
        %400 = vmatprep.subr.mxu0 0.0
        %401 = vmatpush1.msra.mxu0 0.0
        %402 = vmatprep.subr.mxu0 0.0
        %403 = vmatpush1.msra.mxu0 0.0
        %404 = vmatprep.subr.mxu0 0.0
        %405 = vmatpush1.msra.mxu0 0.0
        %406 = vmatprep.subr.mxu0 0.0
        %407 = vmatpush1.msra.mxu0 0.0
        %408 = vmatprep.subr.mxu0 0.0
        %409 = vmatpush1.msra.mxu0 0.0
        %410 = vmatprep.subr.mxu0 0.0
        %411 = vmatpush1.msra.mxu0 0.0
        %412 = vmatprep.subr.mxu0 0.0
        %413 = vmatpush1.msra.mxu0 %v377
        %414 = vmatprep.subr.mxu0 0.0
        %415 = vmatpush2.msra.mxu0 0.0
        %416 = vmatprep.subr.mxu0 0.0
        %417 = vmatpush2.msra.mxu0 0.0
        %418 = vmatprep.subr.mxu0 0.0
        %419 = vmatpush2.msra.mxu0 0.0
        %420 = vmatprep.subr.mxu0 0.0
        %421 = vmatpush2.msra.mxu0 0.0
        %422 = vmatprep.subr.mxu0 0.0
        %423 = vmatpush2.msra.mxu0 0.0
        %424 = vmatprep.subr.mxu0 0.0
        %425 = vmatpush2.msra.mxu0 0.0
        %426 = vmatprep.subr.mxu0 0.0
        %427 = vmatpush2.msra.mxu0 0.0
        %428 = vmatprep.subr.mxu0 0.0
        %429 = vmatpush2.msra.mxu0 0.0
        %430 = vmatprep.subr.mxu0 0.0
        %431 = vmatpush2.msra.mxu0 0.0
        %432 = vmatprep.subr.mxu0 0.0
        %433 = vmatpush2.msra.mxu0 0.0
        %434 = vmatprep.subr.mxu0 0.0
        %435 = vmatpush2.msra.mxu0 0.0
        %436 = vmatprep.subr.mxu0 0.0
        %437 = vmatpush2.msra.mxu0 0.0
        %438 = vmatprep.subr.mxu0 0.0
        %439 = vmatpush2.msra.mxu0 0.0
        %440 = vmatprep.subr.mxu0 0.0
        %441 = vmatpush2.msra.mxu0 0.0
        %442 = vmatprep.subr.mxu0 0.0
        %443 = vmatpush2.msra.mxu0 0.0
        %444 = vmatprep.subr.mxu0 0.0
        %445 = vmatpush2.msra.mxu0 0.0
        %446 = vmatprep.mubr.f32.mxu0 0.0
        %447 = vmatmul.mubr.f32.gmra.mxu0 %v380
        %v448 = vpop.f32.mrf.mxu0
        %v449 = vadd.f32 0.0, %v448
        %v450 = vpop.f32.mrf.mxu0
        %451 = vdwg.mxu0
        %452 = vrot.lane.b32.xlu0 %v284, 120
        %v453 = vpop.permute.xlu0 %452
        %454 = vrot.lane.b32.xlu0 %v284, 88
        %v455 = vpop.permute.xlu0 %454
        %v456 = vsel %vm290, %v453, 0
        %v458 = vsel %vm290, %v455, 0
        %460 = vmatprep.subr.mxu0 0.0
        %461 = vmatpush1.xpose.msra.mxu0 0.0
        %462 = vmatprep.subr.mxu0 0.0
        %463 = vmatpush1.xpose.msra.mxu0 0.0
        %464 = vmatprep.subr.mxu0 0.0
        %465 = vmatpush1.xpose.msra.mxu0 0.0
        %466 = vmatprep.subr.mxu0 0.0
        %467 = vmatpush1.xpose.msra.mxu0 0.0
        %468 = vmatprep.subr.mxu0 0.0
        %469 = vmatpush1.xpose.msra.mxu0 0.0
        %470 = vmatprep.subr.mxu0 0.0
        %471 = vmatpush1.xpose.msra.mxu0 0.0
        %472 = vmatprep.subr.mxu0 0.0
        %473 = vmatpush1.xpose.msra.mxu0 0.0
        %474 = vmatprep.subr.mxu0 0.0
        %475 = vmatpush1.xpose.msra.mxu0 0.0
        %476 = vmatprep.subr.mxu0 0.0
        %477 = vmatpush1.xpose.msra.mxu0 0.0
        %478 = vmatprep.subr.mxu0 0.0
        %479 = vmatpush1.xpose.msra.mxu0 0.0
        %480 = vmatprep.subr.mxu0 0.0
        %481 = vmatpush1.xpose.msra.mxu0 0.0
        %482 = vmatprep.subr.mxu0 0.0
        %483 = vmatpush1.xpose.msra.mxu0 0.0
        %484 = vmatprep.subr.mxu0 0.0
        %485 = vmatpush1.xpose.msra.mxu0 0.0
        %486 = vmatprep.subr.mxu0 0.0
        %487 = vmatpush1.xpose.msra.mxu0 0.0
        %488 = vmatprep.subr.mxu0 0.0
        %489 = vmatpush1.xpose.msra.mxu0 0.0
        %490 = vmatprep.subr.mxu0 0.0
        %491 = vmatpush1.xpose.msra.mxu0 %v458
        %492 = vmatprep.subr.mxu0 0.0
        %493 = vmatpush2.xpose.msra.mxu0 0.0
        %494 = vmatprep.subr.mxu0 0.0
        %495 = vmatpush2.xpose.msra.mxu0 0.0
        %496 = vmatprep.subr.mxu0 0.0
        %497 = vmatpush2.xpose.msra.mxu0 0.0
        %498 = vmatprep.subr.mxu0 0.0
        %499 = vmatpush2.xpose.msra.mxu0 0.0
        %500 = vmatprep.subr.mxu0 0.0
        %501 = vmatpush2.xpose.msra.mxu0 0.0
        %502 = vmatprep.subr.mxu0 0.0
        %503 = vmatpush2.xpose.msra.mxu0 0.0
        %504 = vmatprep.subr.mxu0 0.0
        %505 = vmatpush2.xpose.msra.mxu0 0.0
        %506 = vmatprep.subr.mxu0 0.0
        %507 = vmatpush2.xpose.msra.mxu0 0.0
        %508 = vmatprep.subr.mxu0 0.0
        %509 = vmatpush2.xpose.msra.mxu0 0.0
        %510 = vmatprep.subr.mxu0 0.0
        %511 = vmatpush2.xpose.msra.mxu0 0.0
        %512 = vmatprep.subr.mxu0 0.0
        %513 = vmatpush2.xpose.msra.mxu0 0.0
        %514 = vmatprep.subr.mxu0 0.0
        %515 = vmatpush2.xpose.msra.mxu0 0.0
        %516 = vmatprep.subr.mxu0 0.0
        %517 = vmatpush2.xpose.msra.mxu0 0.0
        %518 = vmatprep.subr.mxu0 0.0
        %519 = vmatpush2.xpose.msra.mxu0 0.0
        %520 = vmatprep.subr.mxu0 0.0
        %521 = vmatpush2.xpose.msra.mxu0 0.0
        %522 = vmatprep.subr.mxu0 0.0
        %523 = vmatpush2.xpose.msra.mxu0 0.0
        %524 = vmatprep.mubr.f32.mxu0 0.0
        %525 = vmatmul.mubr.f32.gmra.mxu0 %v456
        %v526 = vpop.f32.mrf.mxu0
        %v527 = vadd.f32 0.0, %v526
        %v528 = vpop.f32.mrf.mxu0
        %529 = vdwg.mxu0
        %v530 = vsel %vm290, %v527, -inf
        %531 = vmax.xlane.f32.xlu0 %v530
        %v532 = vpop.xlane.xlu0 %531
        %v533 = vsub.f32 %v527, %v532
        %v534 = vmul.f32 %v533, 1.442695
        %v535 = vpow.pop %v534
        %v536 = vsel %vm290, %v535, 0.0
        %537 = vadd.xlane.f32.xlu0 %v536
        %v538 = vpop.xlane.xlu0 %537
        %v539 = vrcp.pop %v538
        %v540 = vmul.f32 %v535, %v539
        %541 = vrot.lane.b32.xlu0 %v284, 56
        %v542 = vpop.permute.xlu0 %541
        %v545 = vsel %vm290, %v540, 0
        %547 = vmatprep.subr.mxu0 0.0
        %548 = vmatpush1.msra.mxu0 0.0
        %549 = vmatprep.subr.mxu0 0.0
        %550 = vmatpush1.msra.mxu0 0.0
        %551 = vmatprep.subr.mxu0 0.0
        %552 = vmatpush1.msra.mxu0 0.0
        %553 = vmatprep.subr.mxu0 0.0
        %554 = vmatpush1.msra.mxu0 0.0
        %555 = vmatprep.subr.mxu0 0.0
        %556 = vmatpush1.msra.mxu0 0.0
        %557 = vmatprep.subr.mxu0 0.0
        %558 = vmatpush1.msra.mxu0 0.0
        %559 = vmatprep.subr.mxu0 0.0
        %560 = vmatpush1.msra.mxu0 0.0
        %561 = vmatprep.subr.mxu0 0.0
        %562 = vmatpush1.msra.mxu0 0.0
        %563 = vmatprep.subr.mxu0 0.0
        %564 = vmatpush1.msra.mxu0 0.0
        %565 = vmatprep.subr.mxu0 0.0
        %566 = vmatpush1.msra.mxu0 0.0
        %567 = vmatprep.subr.mxu0 0.0
        %568 = vmatpush1.msra.mxu0 0.0
        %569 = vmatprep.subr.mxu0 0.0
        %570 = vmatpush1.msra.mxu0 0.0
        %571 = vmatprep.subr.mxu0 0.0
        %572 = vmatpush1.msra.mxu0 0.0
        %573 = vmatprep.subr.mxu0 0.0
        %574 = vmatpush1.msra.mxu0 0.0
        %575 = vmatprep.subr.mxu0 0.0
        %576 = vmatpush1.msra.mxu0 0.0
        %577 = vmatprep.subr.mxu0 0.0
        %578 = vmatpush1.msra.mxu0 %v542
        %579 = vmatprep.subr.mxu0 0.0
        %580 = vmatpush2.msra.mxu0 0.0
        %581 = vmatprep.subr.mxu0 0.0
        %582 = vmatpush2.msra.mxu0 0.0
        %583 = vmatprep.subr.mxu0 0.0
        %584 = vmatpush2.msra.mxu0 0.0
        %585 = vmatprep.subr.mxu0 0.0
        %586 = vmatpush2.msra.mxu0 0.0
        %587 = vmatprep.subr.mxu0 0.0
        %588 = vmatpush2.msra.mxu0 0.0
        %589 = vmatprep.subr.mxu0 0.0
        %590 = vmatpush2.msra.mxu0 0.0
        %591 = vmatprep.subr.mxu0 0.0
        %592 = vmatpush2.msra.mxu0 0.0
        %593 = vmatprep.subr.mxu0 0.0
        %594 = vmatpush2.msra.mxu0 0.0
        %595 = vmatprep.subr.mxu0 0.0
        %596 = vmatpush2.msra.mxu0 0.0
        %597 = vmatprep.subr.mxu0 0.0
        %598 = vmatpush2.msra.mxu0 0.0
        %599 = vmatprep.subr.mxu0 0.0
        %600 = vmatpush2.msra.mxu0 0.0
        %601 = vmatprep.subr.mxu0 0.0
        %602 = vmatpush2.msra.mxu0 0.0
        %603 = vmatprep.subr.mxu0 0.0
        %604 = vmatpush2.msra.mxu0 0.0
        %605 = vmatprep.subr.mxu0 0.0
        %606 = vmatpush2.msra.mxu0 0.0
        %607 = vmatprep.subr.mxu0 0.0
        %608 = vmatpush2.msra.mxu0 0.0
        %609 = vmatprep.subr.mxu0 0.0
        %610 = vmatpush2.msra.mxu0 0.0
        %611 = vmatprep.mubr.f32.mxu0 0.0
        %612 = vmatmul.mubr.f32.gmra.mxu0 %v545
        %v613 = vpop.f32.mrf.mxu0
        %v614 = vadd.f32 0.0, %v613
        %v615 = vpop.f32.mrf.mxu0
        %616 = vdwg.mxu0
        %617 = vrot.lane.b32.xlu0 %v284, 112
        %v618 = vpop.permute.xlu0 %617
        %619 = vrot.lane.b32.xlu0 %v284, 80
        %v620 = vpop.permute.xlu0 %619
        %v621 = vsel %vm290, %v618, 0
        %v623 = vsel %vm290, %v620, 0
        %625 = vmatprep.subr.mxu0 0.0
        %626 = vmatpush1.xpose.msra.mxu0 0.0
        %627 = vmatprep.subr.mxu0 0.0
        %628 = vmatpush1.xpose.msra.mxu0 0.0
        %629 = vmatprep.subr.mxu0 0.0
        %630 = vmatpush1.xpose.msra.mxu0 0.0
        %631 = vmatprep.subr.mxu0 0.0
        %632 = vmatpush1.xpose.msra.mxu0 0.0
        %633 = vmatprep.subr.mxu0 0.0
        %634 = vmatpush1.xpose.msra.mxu0 0.0
        %635 = vmatprep.subr.mxu0 0.0
        %636 = vmatpush1.xpose.msra.mxu0 0.0
        %637 = vmatprep.subr.mxu0 0.0
        %638 = vmatpush1.xpose.msra.mxu0 0.0
        %639 = vmatprep.subr.mxu0 0.0
        %640 = vmatpush1.xpose.msra.mxu0 0.0
        %641 = vmatprep.subr.mxu0 0.0
        %642 = vmatpush1.xpose.msra.mxu0 0.0
        %643 = vmatprep.subr.mxu0 0.0
        %644 = vmatpush1.xpose.msra.mxu0 0.0
        %645 = vmatprep.subr.mxu0 0.0
        %646 = vmatpush1.xpose.msra.mxu0 0.0
        %647 = vmatprep.subr.mxu0 0.0
        %648 = vmatpush1.xpose.msra.mxu0 0.0
        %649 = vmatprep.subr.mxu0 0.0
        %650 = vmatpush1.xpose.msra.mxu0 0.0
        %651 = vmatprep.subr.mxu0 0.0
        %652 = vmatpush1.xpose.msra.mxu0 0.0
        %653 = vmatprep.subr.mxu0 0.0
        %654 = vmatpush1.xpose.msra.mxu0 0.0
        %655 = vmatprep.subr.mxu0 0.0
        %656 = vmatpush1.xpose.msra.mxu0 %v623
        %657 = vmatprep.subr.mxu0 0.0
        %658 = vmatpush2.xpose.msra.mxu0 0.0
        %659 = vmatprep.subr.mxu0 0.0
        %660 = vmatpush2.xpose.msra.mxu0 0.0
        %661 = vmatprep.subr.mxu0 0.0
        %662 = vmatpush2.xpose.msra.mxu0 0.0
        %663 = vmatprep.subr.mxu0 0.0
        %664 = vmatpush2.xpose.msra.mxu0 0.0
        %665 = vmatprep.subr.mxu0 0.0
        %666 = vmatpush2.xpose.msra.mxu0 0.0
        %667 = vmatprep.subr.mxu0 0.0
        %668 = vmatpush2.xpose.msra.mxu0 0.0
        %669 = vmatprep.subr.mxu0 0.0
        %670 = vmatpush2.xpose.msra.mxu0 0.0
        %671 = vmatprep.subr.mxu0 0.0
        %672 = vmatpush2.xpose.msra.mxu0 0.0
        %673 = vmatprep.subr.mxu0 0.0
        %674 = vmatpush2.xpose.msra.mxu0 0.0
        %675 = vmatprep.subr.mxu0 0.0
        %676 = vmatpush2.xpose.msra.mxu0 0.0
        %677 = vmatprep.subr.mxu0 0.0
        %678 = vmatpush2.xpose.msra.mxu0 0.0
        %679 = vmatprep.subr.mxu0 0.0
        %680 = vmatpush2.xpose.msra.mxu0 0.0
        %681 = vmatprep.subr.mxu0 0.0
        %682 = vmatpush2.xpose.msra.mxu0 0.0
        %683 = vmatprep.subr.mxu0 0.0
        %684 = vmatpush2.xpose.msra.mxu0 0.0
        %685 = vmatprep.subr.mxu0 0.0
        %686 = vmatpush2.xpose.msra.mxu0 0.0
        %687 = vmatprep.subr.mxu0 0.0
        %688 = vmatpush2.xpose.msra.mxu0 0.0
        %689 = vmatprep.mubr.f32.mxu0 0.0
        %690 = vmatmul.mubr.f32.gmra.mxu0 %v621
        %v691 = vpop.f32.mrf.mxu0
        %v692 = vadd.f32 0.0, %v691
        %v693 = vpop.f32.mrf.mxu0
        %694 = vdwg.mxu0
        %v695 = vsel %vm290, %v692, -inf
        %696 = vmax.xlane.f32.xlu0 %v695
        %v697 = vpop.xlane.xlu0 %696
        %v698 = vsub.f32 %v692, %v697
        %v699 = vmul.f32 %v698, 1.442695
        %v700 = vpow.pop %v699
        %v701 = vsel %vm290, %v700, 0.0
        %702 = vadd.xlane.f32.xlu0 %v701
        %v703 = vpop.xlane.xlu0 %702
        %v704 = vrcp.pop %v703
        %v705 = vmul.f32 %v700, %v704
        %706 = vrot.lane.b32.xlu0 %v284, 48
        %v707 = vpop.permute.xlu0 %706
        %v710 = vsel %vm290, %v705, 0
        %712 = vmatprep.subr.mxu0 0.0
        %713 = vmatpush1.msra.mxu0 0.0
        %714 = vmatprep.subr.mxu0 0.0
        %715 = vmatpush1.msra.mxu0 0.0
        %716 = vmatprep.subr.mxu0 0.0
        %717 = vmatpush1.msra.mxu0 0.0
        %718 = vmatprep.subr.mxu0 0.0
        %719 = vmatpush1.msra.mxu0 0.0
        %720 = vmatprep.subr.mxu0 0.0
        %721 = vmatpush1.msra.mxu0 0.0
        %722 = vmatprep.subr.mxu0 0.0
        %723 = vmatpush1.msra.mxu0 0.0
        %724 = vmatprep.subr.mxu0 0.0
        %725 = vmatpush1.msra.mxu0 0.0
        %726 = vmatprep.subr.mxu0 0.0
        %727 = vmatpush1.msra.mxu0 0.0
        %728 = vmatprep.subr.mxu0 0.0
        %729 = vmatpush1.msra.mxu0 0.0
        %730 = vmatprep.subr.mxu0 0.0
        %731 = vmatpush1.msra.mxu0 0.0
        %732 = vmatprep.subr.mxu0 0.0
        %733 = vmatpush1.msra.mxu0 0.0
        %734 = vmatprep.subr.mxu0 0.0
        %735 = vmatpush1.msra.mxu0 0.0
        %736 = vmatprep.subr.mxu0 0.0
        %737 = vmatpush1.msra.mxu0 0.0
        %738 = vmatprep.subr.mxu0 0.0
        %739 = vmatpush1.msra.mxu0 0.0
        %740 = vmatprep.subr.mxu0 0.0
        %741 = vmatpush1.msra.mxu0 0.0
        %742 = vmatprep.subr.mxu0 0.0
        %743 = vmatpush1.msra.mxu0 %v707
        %744 = vmatprep.subr.mxu0 0.0
        %745 = vmatpush2.msra.mxu0 0.0
        %746 = vmatprep.subr.mxu0 0.0
        %747 = vmatpush2.msra.mxu0 0.0
        %748 = vmatprep.subr.mxu0 0.0
        %749 = vmatpush2.msra.mxu0 0.0
        %750 = vmatprep.subr.mxu0 0.0
        %751 = vmatpush2.msra.mxu0 0.0
        %752 = vmatprep.subr.mxu0 0.0
        %753 = vmatpush2.msra.mxu0 0.0
        %754 = vmatprep.subr.mxu0 0.0
        %755 = vmatpush2.msra.mxu0 0.0
        %756 = vmatprep.subr.mxu0 0.0
        %757 = vmatpush2.msra.mxu0 0.0
        %758 = vmatprep.subr.mxu0 0.0
        %759 = vmatpush2.msra.mxu0 0.0
        %760 = vmatprep.subr.mxu0 0.0
        %761 = vmatpush2.msra.mxu0 0.0
        %762 = vmatprep.subr.mxu0 0.0
        %763 = vmatpush2.msra.mxu0 0.0
        %764 = vmatprep.subr.mxu0 0.0
        %765 = vmatpush2.msra.mxu0 0.0
        %766 = vmatprep.subr.mxu0 0.0
        %767 = vmatpush2.msra.mxu0 0.0
        %768 = vmatprep.subr.mxu0 0.0
        %769 = vmatpush2.msra.mxu0 0.0
        %770 = vmatprep.subr.mxu0 0.0
        %771 = vmatpush2.msra.mxu0 0.0
        %772 = vmatprep.subr.mxu0 0.0
        %773 = vmatpush2.msra.mxu0 0.0
        %774 = vmatprep.subr.mxu0 0.0
        %775 = vmatpush2.msra.mxu0 0.0
        %776 = vmatprep.mubr.f32.mxu0 0.0
        %777 = vmatmul.mubr.f32.gmra.mxu0 %v710
        %v778 = vpop.f32.mrf.mxu0
        %v779 = vadd.f32 0.0, %v778
        %v780 = vpop.f32.mrf.mxu0
        %781 = vdwg.mxu0
        %782 = vrot.lane.b32.xlu0 %v284, 104
        %v783 = vpop.permute.xlu0 %782
        %784 = vrot.lane.b32.xlu0 %v284, 72
        %v785 = vpop.permute.xlu0 %784
        %v786 = vsel %vm290, %v783, 0
        %v788 = vsel %vm290, %v785, 0
        %790 = vmatprep.subr.mxu0 0.0
        %791 = vmatpush1.xpose.msra.mxu0 0.0
        %792 = vmatprep.subr.mxu0 0.0
        %793 = vmatpush1.xpose.msra.mxu0 0.0
        %794 = vmatprep.subr.mxu0 0.0
        %795 = vmatpush1.xpose.msra.mxu0 0.0
        %796 = vmatprep.subr.mxu0 0.0
        %797 = vmatpush1.xpose.msra.mxu0 0.0
        %798 = vmatprep.subr.mxu0 0.0
        %799 = vmatpush1.xpose.msra.mxu0 0.0
        %800 = vmatprep.subr.mxu0 0.0
        %801 = vmatpush1.xpose.msra.mxu0 0.0
        %802 = vmatprep.subr.mxu0 0.0
        %803 = vmatpush1.xpose.msra.mxu0 0.0
        %804 = vmatprep.subr.mxu0 0.0
        %805 = vmatpush1.xpose.msra.mxu0 0.0
        %806 = vmatprep.subr.mxu0 0.0
        %807 = vmatpush1.xpose.msra.mxu0 0.0
        %808 = vmatprep.subr.mxu0 0.0
        %809 = vmatpush1.xpose.msra.mxu0 0.0
        %810 = vmatprep.subr.mxu0 0.0
        %811 = vmatpush1.xpose.msra.mxu0 0.0
        %812 = vmatprep.subr.mxu0 0.0
        %813 = vmatpush1.xpose.msra.mxu0 0.0
        %814 = vmatprep.subr.mxu0 0.0
        %815 = vmatpush1.xpose.msra.mxu0 0.0
        %816 = vmatprep.subr.mxu0 0.0
        %817 = vmatpush1.xpose.msra.mxu0 0.0
        %818 = vmatprep.subr.mxu0 0.0
        %819 = vmatpush1.xpose.msra.mxu0 0.0
        %820 = vmatprep.subr.mxu0 0.0
        %821 = vmatpush1.xpose.msra.mxu0 %v788
        %822 = vmatprep.subr.mxu0 0.0
        %823 = vmatpush2.xpose.msra.mxu0 0.0
        %824 = vmatprep.subr.mxu0 0.0
        %825 = vmatpush2.xpose.msra.mxu0 0.0
        %826 = vmatprep.subr.mxu0 0.0
        %827 = vmatpush2.xpose.msra.mxu0 0.0
        %828 = vmatprep.subr.mxu0 0.0
        %829 = vmatpush2.xpose.msra.mxu0 0.0
        %830 = vmatprep.subr.mxu0 0.0
        %831 = vmatpush2.xpose.msra.mxu0 0.0
        %832 = vmatprep.subr.mxu0 0.0
        %833 = vmatpush2.xpose.msra.mxu0 0.0
        %834 = vmatprep.subr.mxu0 0.0
        %835 = vmatpush2.xpose.msra.mxu0 0.0
        %836 = vmatprep.subr.mxu0 0.0
        %837 = vmatpush2.xpose.msra.mxu0 0.0
        %838 = vmatprep.subr.mxu0 0.0
        %839 = vmatpush2.xpose.msra.mxu0 0.0
        %840 = vmatprep.subr.mxu0 0.0
        %841 = vmatpush2.xpose.msra.mxu0 0.0
        %842 = vmatprep.subr.mxu0 0.0
        %843 = vmatpush2.xpose.msra.mxu0 0.0
        %844 = vmatprep.subr.mxu0 0.0
        %845 = vmatpush2.xpose.msra.mxu0 0.0
        %846 = vmatprep.subr.mxu0 0.0
        %847 = vmatpush2.xpose.msra.mxu0 0.0
        %848 = vmatprep.subr.mxu0 0.0
        %849 = vmatpush2.xpose.msra.mxu0 0.0
        %850 = vmatprep.subr.mxu0 0.0
        %851 = vmatpush2.xpose.msra.mxu0 0.0
        %852 = vmatprep.subr.mxu0 0.0
        %853 = vmatpush2.xpose.msra.mxu0 0.0
        %854 = vmatprep.mubr.f32.mxu0 0.0
        %855 = vmatmul.mubr.f32.gmra.mxu0 %v786
        %v856 = vpop.f32.mrf.mxu0
        %v857 = vadd.f32 0.0, %v856
        %v858 = vpop.f32.mrf.mxu0
        %859 = vdwg.mxu0
        %v860 = vsel %vm290, %v857, -inf
        %861 = vmax.xlane.f32.xlu0 %v860
        %v862 = vpop.xlane.xlu0 %861
        %v863 = vsub.f32 %v857, %v862
        %v864 = vmul.f32 %v863, 1.442695
        %v865 = vpow.pop %v864
        %v866 = vsel %vm290, %v865, 0.0
        %867 = vadd.xlane.f32.xlu0 %v866
        %v868 = vpop.xlane.xlu0 %867
        %v869 = vrcp.pop %v868
        %v870 = vmul.f32 %v865, %v869
        %871 = vrot.lane.b32.xlu0 %v284, 40
        %v872 = vpop.permute.xlu0 %871
        %v875 = vsel %vm290, %v870, 0
        %877 = vmatprep.subr.mxu0 0.0
        %878 = vmatpush1.msra.mxu0 0.0
        %879 = vmatprep.subr.mxu0 0.0
        %880 = vmatpush1.msra.mxu0 0.0
        %881 = vmatprep.subr.mxu0 0.0
        %882 = vmatpush1.msra.mxu0 0.0
        %883 = vmatprep.subr.mxu0 0.0
        %884 = vmatpush1.msra.mxu0 0.0
        %885 = vmatprep.subr.mxu0 0.0
        %886 = vmatpush1.msra.mxu0 0.0
        %887 = vmatprep.subr.mxu0 0.0
        %888 = vmatpush1.msra.mxu0 0.0
        %889 = vmatprep.subr.mxu0 0.0
        %890 = vmatpush1.msra.mxu0 0.0
        %891 = vmatprep.subr.mxu0 0.0
        %892 = vmatpush1.msra.mxu0 0.0
        %893 = vmatprep.subr.mxu0 0.0
        %894 = vmatpush1.msra.mxu0 0.0
        %895 = vmatprep.subr.mxu0 0.0
        %896 = vmatpush1.msra.mxu0 0.0
        %897 = vmatprep.subr.mxu0 0.0
        %898 = vmatpush1.msra.mxu0 0.0
        %899 = vmatprep.subr.mxu0 0.0
        %900 = vmatpush1.msra.mxu0 0.0
        %901 = vmatprep.subr.mxu0 0.0
        %902 = vmatpush1.msra.mxu0 0.0
        %903 = vmatprep.subr.mxu0 0.0
        %904 = vmatpush1.msra.mxu0 0.0
        %905 = vmatprep.subr.mxu0 0.0
        %906 = vmatpush1.msra.mxu0 0.0
        %907 = vmatprep.subr.mxu0 0.0
        %908 = vmatpush1.msra.mxu0 %v872
        %909 = vmatprep.subr.mxu0 0.0
        %910 = vmatpush2.msra.mxu0 0.0
        %911 = vmatprep.subr.mxu0 0.0
        %912 = vmatpush2.msra.mxu0 0.0
        %913 = vmatprep.subr.mxu0 0.0
        %914 = vmatpush2.msra.mxu0 0.0
        %915 = vmatprep.subr.mxu0 0.0
        %916 = vmatpush2.msra.mxu0 0.0
        %917 = vmatprep.subr.mxu0 0.0
        %918 = vmatpush2.msra.mxu0 0.0
        %919 = vmatprep.subr.mxu0 0.0
        %920 = vmatpush2.msra.mxu0 0.0
        %921 = vmatprep.subr.mxu0 0.0
        %922 = vmatpush2.msra.mxu0 0.0
        %923 = vmatprep.subr.mxu0 0.0
        %924 = vmatpush2.msra.mxu0 0.0
        %925 = vmatprep.subr.mxu0 0.0
        %926 = vmatpush2.msra.mxu0 0.0
        %927 = vmatprep.subr.mxu0 0.0
        %928 = vmatpush2.msra.mxu0 0.0
        %929 = vmatprep.subr.mxu0 0.0
        %930 = vmatpush2.msra.mxu0 0.0
        %931 = vmatprep.subr.mxu0 0.0
        %932 = vmatpush2.msra.mxu0 0.0
        %933 = vmatprep.subr.mxu0 0.0
        %934 = vmatpush2.msra.mxu0 0.0
        %935 = vmatprep.subr.mxu0 0.0
        %936 = vmatpush2.msra.mxu0 0.0
        %937 = vmatprep.subr.mxu0 0.0
        %938 = vmatpush2.msra.mxu0 0.0
        %939 = vmatprep.subr.mxu0 0.0
        %940 = vmatpush2.msra.mxu0 0.0
        %941 = vmatprep.mubr.f32.mxu0 0.0
        %942 = vmatmul.mubr.f32.gmra.mxu0 %v875
        %v943 = vpop.f32.mrf.mxu0
        %v944 = vadd.f32 0.0, %v943
        %v945 = vpop.f32.mrf.mxu0
        %946 = vdwg.mxu0
        %948 = vrot.lane.b32.xlu0 %v614, 8
        %v949 = vpop.permute.xlu0 %948
        %952 = vrot.lane.b32.xlu0 %v779, 16
        %v953 = vpop.permute.xlu0 %952
        %956 = vrot.lane.b32.xlu0 %v944, 24
        %v957 = vpop.permute.xlu0 %956
        %v959 = vsel %vm290, %v449, %v949
        %vm960 = vcmask 130048
        %v961 = vsel %vm960, %v959, %v953
        %vm962 = vcmask 195584
        %v963 = vsel %vm962, %v961, %v957
        %v964 = vtanh.pop %v963
        %965 = vst.msk [vmem:[%s200] sm:$0xff] %vm213, %v964
        %s966 = sand.u32 %s97, 1
        %s967 = scalar_lea.sflag [#allocation4], %s966
        %s968 = sand.u32 %s97, 1
        %s969 = smul.addr %s968, 8
        %s970 = scalar_lea.vmem [#allocation7], %s969
        // Predicated region
        $region41: #{tpu_custom_call.1} parent=31 // pred_check
          %p971 = pneg %p107
        $region42: #{tpu_custom_call.1} parent=31 // pred_check_branch
          %973 = sbr.rel (%p971) target = $region44
        $region43: #{tpu_custom_call.1} parent=31 // pred_region
          %s975 = ssub.s32 128, 128
          %976 = vsyncadd %s967, %s975
          %s977 = smul.addr %s21, 128
          %s978 = scalar_lea.hbm %s3, %s977
          %s980 = sshll.u32 %s970, 4
          %s981 = int_to_ptr.vmem [resolvable:$true] %s980
          %983 = dma.vmem_to_hbm [thread:$0]  %s981, 128, %s978, %s967
        $region44: #{tpu_custom_call.1} parent=31 // pred_fallthru
          _
      $region32: #{tpu_custom_call.1} parent=5 // pred_fallthru
        _
      %p984 = scmp.le.s32.totalorder 2, %s16
      // Predicated region
      $region45: #{tpu_custom_call.1} parent=5 // pred_check
        %p985 = pneg %p984
      $region46: #{tpu_custom_call.1} parent=5 // pred_check_branch
        %987 = sbr.rel (%p985) target = $region48
      $region47: #{tpu_custom_call.1} parent=5 // pred_region
        %s988 = ssub.s32 %s16, 2
        // Predicated region
        $region49: #{tpu_custom_call.1} parent=47 // pred_check
          %p989 = pneg %p113
        $region50: #{tpu_custom_call.1} parent=47 // pred_check_branch
          %991 = sbr.rel (%p989) target = $region52
        $region51: #{tpu_custom_call.1} parent=47 // pred_region
          %s992 = sand.u32 %s98, 1
          %s993 = scalar_lea.sflag [#allocation4], %s992
          %s994 = sand.u32 %s98, 1
          %s995 = smul.addr %s994, 8
          %s996 = scalar_lea.vmem [#allocation7], %s995
          %997 = dma.done %s993, 128
        $region52: #{tpu_custom_call.1} parent=47 // pred_fallthru
          _
      $region48: #{tpu_custom_call.1} parent=5 // pred_fallthru
        _
    $region6: #{tpu_custom_call.1} parent=1 // loop_footer
      %s20 = sadd.s32 1, %s16
    $region7: #{tpu_custom_call.1} parent=1 // loop_footer_branch
      %15 = sbr.rel target = $region3
    $region8: #{tpu_custom_call.1} parent=1 // loop_exit
      _
    %998 = vsyncpa [#allocation3], 1
    %s999 = scalar_lea.sflag [#allocation3], 1
    %1000 = vsyncpa %s999, 1
    %1001 = vsyncpa [#allocation6], 1
    %1002 = vsyncpa [#allocation4], 1
    %s1003 = scalar_lea.sflag [#allocation4], 1
    %1004 = vsyncpa %s1003, 1

</llo_original>
